<compile_context>
chip_gen: v6e
topology: v6e:2x2x1
jax: 0.10.0
libtpu: 0.0.40
codegen_flags: <defaults>
</compile_context>

<pallas_src>
import functools

import jax
import jax.numpy as jnp
from jax.experimental import pallas as pl
from jax.experimental.pallas import tpu as pltpu

BN_EPS = 1e-5
NEG_BIG = -1e30                  # softmax mask value for padded class lanes
H1, H2, H3 = 384, 256, 128       # lane-dense (128-aligned) hidden widths


def _round_up(n, m):
    return ((n + m - 1) // m) * m


def _mlp_kernel(x_ref, w1_ref, w2_ref, w3_ref, w4_ref, vec_ref, out_ref):
    """Fused fc -> BN(train) -> ReLU (x3), then fc -> Softmax.

    Weights are bf16; activations are cast to bf16 for the MXU, accumulation
    is f32.  vec_ref is one (8, H1) f32 slab:
      rows 0/1: gamma1 / beta1 (300 real lanes, pad lanes 0)
      rows 2/3: gamma2 / beta2 (200 real lanes, pad lanes 0)
      rows 4/5: gamma3 / beta3 (100 real lanes, pad lanes 0)
      row  6  : fc4 bias (num_classes real lanes, pad lanes = -1e30 mask)
      row  7  : unused
    """
    def bn_relu(h, gamma, beta):
        # Train-mode BatchNorm folded into one FMA: h * scale + shift.
        mu = jnp.mean(h, axis=0, keepdims=True)
        # E[h^2]-mu^2 can round slightly negative -> clamp before rsqrt.
        var = jnp.maximum(jnp.mean(h * h, axis=0, keepdims=True) - mu * mu, 0.0)
        scale = gamma * jax.lax.rsqrt(var + BN_EPS)
        shift = beta - mu * scale
        return jnp.maximum(h * scale + shift, 0.0)

    def mm(a, w_ref):
        # bf16 x bf16 MXU matmul with f32 accumulation.
        return jnp.dot(a.astype(jnp.bfloat16), w_ref[...],
                       preferred_element_type=jnp.float32)

    # fc biases of layers 1-3 are omitted: cancelled exactly by the BN
    # batch-mean subtraction (training-mode statistics).
    h = bn_relu(mm(x_ref[...], w1_ref), vec_ref[0:1, :], vec_ref[1:2, :])
    h = bn_relu(mm(h, w2_ref), vec_ref[2:3, :H2], vec_ref[3:4, :H2])
    h = bn_relu(mm(h, w3_ref), vec_ref[4:5, :H3], vec_ref[5:6, :H3])

    c_pad = out_ref.shape[1]
    logits = mm(h, w4_ref) + vec_ref[6:7, :c_pad]   # pad lanes -> -1e30
    m = jnp.max(logits, axis=1, keepdims=True)
    e = jnp.exp(logits - m)                         # pad lanes -> exactly 0
    # Exact f32 divide: the approx EUP reciprocal was not accurate enough
    # for rows to sum to 1 within tolerance.
    out_ref[...] = e / jnp.sum(e, axis=1, keepdims=True)


def pack_params(p, features, num_classes):
    """Pad to TPU-friendly shapes, quantize weights to bf16, pack vectors."""
    # Contraction dim only needs bf16 sublane alignment (16), not 128.
    f_pad = _round_up(features, 16)
    c_pad = _round_up(num_classes, 128)

    def pad2(a, r, c):
        return jnp.pad(a, ((0, r - a.shape[0]), (0, c - a.shape[1])))

    def pad_vec(v):                       # (1, n) -> (1, H1), zero fill
        return jnp.pad(v, ((0, 0), (0, H1 - v.shape[1])))

    b4 = jnp.full((1, H1), NEG_BIG, jnp.float32)
    b4 = b4.at[:, :num_classes].set(p["b4"][0])

    vec = jnp.concatenate(
        [pad_vec(p["g1"]), pad_vec(p["be1"]),
         pad_vec(p["g2"]), pad_vec(p["be2"]),
         pad_vec(p["g3"]), pad_vec(p["be3"]),
         b4, jnp.zeros((1, H1), jnp.float32)], axis=0)

    bf16 = jnp.bfloat16
    return {
        "w1": pad2(p["w1"].astype(bf16), f_pad, H1),
        "w2": pad2(p["w2"].astype(bf16), H1, H2),
        "w3": pad2(p["w3"].astype(bf16), H2, H3),
        "w4": pad2(p["w4"].astype(bf16), H3, c_pad),
        "vec": vec,                      # (8, H1) f32: gamma/beta/bias slab
    }


@functools.partial(jax.jit, static_argnames=("num_classes",))
def _forward(x, w1, w2, w3, w4, vec, *, num_classes):
    B = x.shape[0]
    f_pad = w1.shape[0]
    c_pad = w4.shape[1]
    if x.shape[1] != f_pad:               # no-op when features already aligned
        x = jnp.pad(x, ((0, 0), (0, f_pad - x.shape[1])))

    vmem = pl.BlockSpec(memory_space=pltpu.MemorySpace.VMEM)
    out = pl.pallas_call(
        _mlp_kernel,
        out_shape=jax.ShapeDtypeStruct((B, c_pad), jnp.float32),
        in_specs=[vmem] * 6,
        out_specs=vmem,
    )(x, w1, w2, w3, w4, vec)
    return out[:, :num_classes]


def net_forward(x, packed, num_classes):
    """Single grid-less pallas_call: everything resident in VMEM (~0.4 MB)."""
    return _forward(x, packed["w1"], packed["w2"], packed["w3"],
                    packed["w4"], packed["vec"], num_classes=num_classes)


def init_params(key, features, num_classes):
    """Deterministic synthetic parameters (same shapes as the PyTorch module)."""
    dims = [(features, 300), (300, 200), (200, 100), (100, num_classes)]
    params = {}
    keys = jax.random.split(key, 16)
    ki = 0
    for i, (fan_in, fan_out) in enumerate(dims, start=1):
        bound = 1.0 / jnp.sqrt(fan_in)
        params[f"w{i}"] = jax.random.uniform(
            keys[ki], (fan_in, fan_out), jnp.float32, -bound, bound); ki += 1
        params[f"b{i}"] = jax.random.uniform(
            keys[ki], (1, fan_out), jnp.float32, -bound, bound); ki += 1
        if i <= 3:  # BatchNorm affine params (gamma, beta), non-trivial values
            params[f"g{i}"] = 1.0 + 0.1 * jax.random.normal(
                keys[ki], (1, fan_out), jnp.float32); ki += 1
            params[f"be{i}"] = 0.1 * jax.random.normal(
                keys[ki], (1, fan_out), jnp.float32); ki += 1
    return params


def _reference(x, p, dot_dtype=jnp.float32):
    """Plain-JAX, PyTorch-faithful forward (biases included).

    dot_dtype=bfloat16 reproduces the kernel's matmul-input rounding so the
    comparison isolates kernel correctness from bf16 weight quantization.
    """
    def mm(a, b):
        return jnp.dot(a.astype(dot_dtype), b.astype(dot_dtype),
                       preferred_element_type=jnp.float32)

    def bn_relu(h, g, b):
        mu = jnp.mean(h, axis=0, keepdims=True)
        var = jnp.mean((h - mu) ** 2, axis=0, keepdims=True)
        return jnp.maximum((h - mu) / jnp.sqrt(var + BN_EPS) * g + b, 0.0)

    h = bn_relu(mm(x, p["w1"]) + p["b1"], p["g1"], p["be1"])
    h = bn_relu(mm(h, p["w2"]) + p["b2"], p["g2"], p["be2"])
    h = bn_relu(mm(h, p["w3"]) + p["b3"], p["g3"], p["be3"])
    return jax.nn.softmax(mm(h, p["w4"]) + p["b4"], axis=1)


if __name__ == "__main__":
    B, FEATURES, NUM_CLASSES = 8, 32, 10

    key = jax.random.PRNGKey(0)
    k_x, k_p = jax.random.split(key)
    x = jax.random.normal(k_x, (B, FEATURES), dtype=jnp.float32)
    params = init_params(k_p, FEATURES, NUM_CLASSES)
    packed = pack_params(params, FEATURES, NUM_CLASSES)

    out = jax.block_until_ready(net_forward(x, packed, NUM_CLASSES))

    # Reference with the same bf16 matmul-input rounding as the kernel.
    ref_q = _reference(x, params, dot_dtype=jnp.bfloat16)
    # Full-f32, PyTorch-faithful reference (loose: measures bf16 quant only).
    ref_f = _reference(x, params)

    assert out.shape == (B, NUM_CLASSES)
    assert bool(jnp.all(jnp.isfinite(out)))
    assert jnp.allclose(jnp.sum(out, axis=1), 1.0, atol=1e-4)
    assert jnp.allclose(out, ref_q, atol=3e-3, rtol=3e-3)
    assert jnp.allclose(out, ref_f, atol=2e-2)

    print("KERNEL_OK")
</pallas_src>

<mosaic_0001>
module attributes {stable_mosaic.version = 11 : i64} {
  func.func @_mlp_kernel(%arg0: memref<8x32xf32, #tpu.memory_space<vmem>>, %arg1: memref<32x384xbf16, #tpu.memory_space<vmem>>, %arg2: memref<384x256xbf16, #tpu.memory_space<vmem>>, %arg3: memref<256x128xbf16, #tpu.memory_space<vmem>>, %arg4: memref<128x128xbf16, #tpu.memory_space<vmem>>, %arg5: memref<8x384xf32, #tpu.memory_space<vmem>>, %arg6: memref<8x128xf32, #tpu.memory_space<vmem>>) attributes {dimension_semantics = [], scalar_prefetch = 0 : i64, scratch_operands = 0 : i64, tpu.core_type = #tpu.core_type<tc>} {
    %c0 = arith.constant 0 : index
    %c0_0 = arith.constant 0 : index
    %0 = vector.load %arg0[%c0, %c0_0] : memref<8x32xf32, #tpu.memory_space<vmem>>, vector<8x32xf32>
    %1 = arith.truncf %0 : vector<8x32xf32> to vector<8x32xbf16>
    %c0_1 = arith.constant 0 : index
    %c0_2 = arith.constant 0 : index
    %2 = vector.load %arg1[%c0_1, %c0_2] : memref<32x384xbf16, #tpu.memory_space<vmem>>, vector<32x384xbf16>
    %cst = arith.constant dense<0.000000e+00> : vector<8x384xf32>
    %3 = tpu.matmul %1, %2, %cst {dimension_numbers = #tpu.dot_dimension_numbers<[1], [0], [0], [1], [0, 0, 1, 1], [], []>} : vector<8x32xbf16>, vector<32x384xbf16>, vector<8x384xf32> -> vector<8x384xf32>
    %c0_3 = arith.constant 0 : index
    %c0_4 = arith.constant 0 : index
    %4 = vector.load %arg5[%c0_3, %c0_4] : memref<8x384xf32, #tpu.memory_space<vmem>>, vector<1x384xf32>
    %c1 = arith.constant 1 : index
    %c0_5 = arith.constant 0 : index
    %5 = vector.load %arg5[%c1, %c0_5] : memref<8x384xf32, #tpu.memory_space<vmem>>, vector<1x384xf32>
    %cst_6 = arith.constant dense<0.000000e+00> : vector<384xf32>
    %6 = vector.multi_reduction <add>, %3, %cst_6 [0] : vector<8x384xf32> to vector<384xf32>
    %7 = vector.shape_cast %6 : vector<384xf32> to vector<1x384xf32>
    %cst_7 = arith.constant 8.000000e+00 : f32
    %8 = vector.broadcast %cst_7 : f32 to vector<1x384xf32>
    %9 = arith.divf %7, %8 : vector<1x384xf32>
    %10 = arith.mulf %3, %3 : vector<8x384xf32>
    %cst_8 = arith.constant dense<0.000000e+00> : vector<384xf32>
    %11 = vector.multi_reduction <add>, %10, %cst_8 [0] : vector<8x384xf32> to vector<384xf32>
    %12 = vector.shape_cast %11 : vector<384xf32> to vector<1x384xf32>
    %cst_9 = arith.constant 8.000000e+00 : f32
    %13 = vector.broadcast %cst_9 : f32 to vector<1x384xf32>
    %14 = arith.divf %12, %13 : vector<1x384xf32>
    %15 = arith.mulf %9, %9 : vector<1x384xf32>
    %16 = arith.subf %14, %15 : vector<1x384xf32>
    %cst_10 = arith.constant 0.000000e+00 : f32
    %17 = vector.broadcast %cst_10 : f32 to vector<1x384xf32>
    %18 = arith.maximumf %16, %17 : vector<1x384xf32>
    %cst_11 = arith.constant 9.99999974E-6 : f32
    %19 = vector.broadcast %cst_11 : f32 to vector<1x384xf32>
    %20 = arith.addf %18, %19 : vector<1x384xf32>
    %21 = math.rsqrt %20 : vector<1x384xf32>
    %22 = arith.mulf %4, %21 : vector<1x384xf32>
    %23 = arith.mulf %9, %22 : vector<1x384xf32>
    %24 = arith.subf %5, %23 : vector<1x384xf32>
    %25 = vector.broadcast %22 : vector<1x384xf32> to vector<8x384xf32>
    %26 = arith.mulf %3, %25 : vector<8x384xf32>
    %27 = vector.broadcast %24 : vector<1x384xf32> to vector<8x384xf32>
    %28 = arith.addf %26, %27 : vector<8x384xf32>
    %cst_12 = arith.constant 0.000000e+00 : f32
    %29 = vector.broadcast %cst_12 : f32 to vector<8x384xf32>
    %30 = arith.maximumf %28, %29 : vector<8x384xf32>
    %31 = arith.truncf %30 : vector<8x384xf32> to vector<8x384xbf16>
    %c0_13 = arith.constant 0 : index
    %c0_14 = arith.constant 0 : index
    %32 = vector.load %arg2[%c0_13, %c0_14] : memref<384x256xbf16, #tpu.memory_space<vmem>>, vector<384x256xbf16>
    %cst_15 = arith.constant dense<0.000000e+00> : vector<8x256xf32>
    %33 = tpu.matmul %31, %32, %cst_15 {dimension_numbers = #tpu.dot_dimension_numbers<[1], [0], [0], [1], [0, 0, 1, 1], [], []>} : vector<8x384xbf16>, vector<384x256xbf16>, vector<8x256xf32> -> vector<8x256xf32>
    %c2 = arith.constant 2 : index
    %c0_16 = arith.constant 0 : index
    %34 = vector.load %arg5[%c2, %c0_16] : memref<8x384xf32, #tpu.memory_space<vmem>>, vector<1x256xf32>
    %c3 = arith.constant 3 : index
    %c0_17 = arith.constant 0 : index
    %35 = vector.load %arg5[%c3, %c0_17] : memref<8x384xf32, #tpu.memory_space<vmem>>, vector<1x256xf32>
    %cst_18 = arith.constant dense<0.000000e+00> : vector<256xf32>
    %36 = vector.multi_reduction <add>, %33, %cst_18 [0] : vector<8x256xf32> to vector<256xf32>
    %37 = vector.shape_cast %36 : vector<256xf32> to vector<1x256xf32>
    %cst_19 = arith.constant 8.000000e+00 : f32
    %38 = vector.broadcast %cst_19 : f32 to vector<1x256xf32>
    %39 = arith.divf %37, %38 : vector<1x256xf32>
    %40 = arith.mulf %33, %33 : vector<8x256xf32>
    %cst_20 = arith.constant dense<0.000000e+00> : vector<256xf32>
    %41 = vector.multi_reduction <add>, %40, %cst_20 [0] : vector<8x256xf32> to vector<256xf32>
    %42 = vector.shape_cast %41 : vector<256xf32> to vector<1x256xf32>
    %cst_21 = arith.constant 8.000000e+00 : f32
    %43 = vector.broadcast %cst_21 : f32 to vector<1x256xf32>
    %44 = arith.divf %42, %43 : vector<1x256xf32>
    %45 = arith.mulf %39, %39 : vector<1x256xf32>
    %46 = arith.subf %44, %45 : vector<1x256xf32>
    %cst_22 = arith.constant 0.000000e+00 : f32
    %47 = vector.broadcast %cst_22 : f32 to vector<1x256xf32>
    %48 = arith.maximumf %46, %47 : vector<1x256xf32>
    %cst_23 = arith.constant 9.99999974E-6 : f32
    %49 = vector.broadcast %cst_23 : f32 to vector<1x256xf32>
    %50 = arith.addf %48, %49 : vector<1x256xf32>
    %51 = math.rsqrt %50 : vector<1x256xf32>
    %52 = arith.mulf %34, %51 : vector<1x256xf32>
    %53 = arith.mulf %39, %52 : vector<1x256xf32>
    %54 = arith.subf %35, %53 : vector<1x256xf32>
    %55 = vector.broadcast %52 : vector<1x256xf32> to vector<8x256xf32>
    %56 = arith.mulf %33, %55 : vector<8x256xf32>
    %57 = vector.broadcast %54 : vector<1x256xf32> to vector<8x256xf32>
    %58 = arith.addf %56, %57 : vector<8x256xf32>
    %cst_24 = arith.constant 0.000000e+00 : f32
    %59 = vector.broadcast %cst_24 : f32 to vector<8x256xf32>
    %60 = arith.maximumf %58, %59 : vector<8x256xf32>
    %61 = arith.truncf %60 : vector<8x256xf32> to vector<8x256xbf16>
    %c0_25 = arith.constant 0 : index
    %c0_26 = arith.constant 0 : index
    %62 = vector.load %arg3[%c0_25, %c0_26] : memref<256x128xbf16, #tpu.memory_space<vmem>>, vector<256x128xbf16>
    %cst_27 = arith.constant dense<0.000000e+00> : vector<8x128xf32>
    %63 = tpu.matmul %61, %62, %cst_27 {dimension_numbers = #tpu.dot_dimension_numbers<[1], [0], [0], [1], [0, 0, 1, 1], [], []>} : vector<8x256xbf16>, vector<256x128xbf16>, vector<8x128xf32> -> vector<8x128xf32>
    %c4 = arith.constant 4 : index
    %c0_28 = arith.constant 0 : index
    %64 = vector.load %arg5[%c4, %c0_28] : memref<8x384xf32, #tpu.memory_space<vmem>>, vector<1x128xf32>
    %c5 = arith.constant 5 : index
    %c0_29 = arith.constant 0 : index
    %65 = vector.load %arg5[%c5, %c0_29] : memref<8x384xf32, #tpu.memory_space<vmem>>, vector<1x128xf32>
    %cst_30 = arith.constant dense<0.000000e+00> : vector<128xf32>
    %66 = vector.multi_reduction <add>, %63, %cst_30 [0] : vector<8x128xf32> to vector<128xf32>
    %67 = vector.shape_cast %66 : vector<128xf32> to vector<1x128xf32>
    %cst_31 = arith.constant 8.000000e+00 : f32
    %68 = vector.broadcast %cst_31 : f32 to vector<1x128xf32>
    %69 = arith.divf %67, %68 : vector<1x128xf32>
    %70 = arith.mulf %63, %63 : vector<8x128xf32>
    %cst_32 = arith.constant dense<0.000000e+00> : vector<128xf32>
    %71 = vector.multi_reduction <add>, %70, %cst_32 [0] : vector<8x128xf32> to vector<128xf32>
    %72 = vector.shape_cast %71 : vector<128xf32> to vector<1x128xf32>
    %cst_33 = arith.constant 8.000000e+00 : f32
    %73 = vector.broadcast %cst_33 : f32 to vector<1x128xf32>
    %74 = arith.divf %72, %73 : vector<1x128xf32>
    %75 = arith.mulf %69, %69 : vector<1x128xf32>
    %76 = arith.subf %74, %75 : vector<1x128xf32>
    %cst_34 = arith.constant 0.000000e+00 : f32
    %77 = vector.broadcast %cst_34 : f32 to vector<1x128xf32>
    %78 = arith.maximumf %76, %77 : vector<1x128xf32>
    %cst_35 = arith.constant 9.99999974E-6 : f32
    %79 = vector.broadcast %cst_35 : f32 to vector<1x128xf32>
    %80 = arith.addf %78, %79 : vector<1x128xf32>
    %81 = math.rsqrt %80 : vector<1x128xf32>
    %82 = arith.mulf %64, %81 : vector<1x128xf32>
    %83 = arith.mulf %69, %82 : vector<1x128xf32>
    %84 = arith.subf %65, %83 : vector<1x128xf32>
    %85 = vector.broadcast %82 : vector<1x128xf32> to vector<8x128xf32>
    %86 = arith.mulf %63, %85 : vector<8x128xf32>
    %87 = vector.broadcast %84 : vector<1x128xf32> to vector<8x128xf32>
    %88 = arith.addf %86, %87 : vector<8x128xf32>
    %cst_36 = arith.constant 0.000000e+00 : f32
    %89 = vector.broadcast %cst_36 : f32 to vector<8x128xf32>
    %90 = arith.maximumf %88, %89 : vector<8x128xf32>
    %91 = arith.truncf %90 : vector<8x128xf32> to vector<8x128xbf16>
    %c0_37 = arith.constant 0 : index
    %c0_38 = arith.constant 0 : index
    %92 = vector.load %arg4[%c0_37, %c0_38] : memref<128x128xbf16, #tpu.memory_space<vmem>>, vector<128x128xbf16>
    %cst_39 = arith.constant dense<0.000000e+00> : vector<8x128xf32>
    %93 = tpu.matmul %91, %92, %cst_39 {dimension_numbers = #tpu.dot_dimension_numbers<[1], [0], [0], [1], [0, 0, 1, 1], [], []>} : vector<8x128xbf16>, vector<128x128xbf16>, vector<8x128xf32> -> vector<8x128xf32>
    %c6 = arith.constant 6 : index
    %c0_40 = arith.constant 0 : index
    %94 = vector.load %arg5[%c6, %c0_40] : memref<8x384xf32, #tpu.memory_space<vmem>>, vector<1x128xf32>
    %95 = vector.broadcast %94 : vector<1x128xf32> to vector<8x128xf32>
    %96 = arith.addf %93, %95 : vector<8x128xf32>
    %cst_41 = arith.constant dense<0xFF800000> : vector<8xf32>
    %97 = vector.multi_reduction <maximumf>, %96, %cst_41 [1] : vector<8x128xf32> to vector<8xf32>
    %98 = vector.shape_cast %97 : vector<8xf32> to vector<8x1xf32>
    %99 = vector.broadcast %98 : vector<8x1xf32> to vector<8x128xf32>
    %100 = arith.subf %96, %99 : vector<8x128xf32>
    %101 = math.exp %100 : vector<8x128xf32>
    %cst_42 = arith.constant dense<0.000000e+00> : vector<8xf32>
    %102 = vector.multi_reduction <add>, %101, %cst_42 [1] : vector<8x128xf32> to vector<8xf32>
    %103 = vector.shape_cast %102 : vector<8xf32> to vector<8x1xf32>
    %104 = vector.broadcast %103 : vector<8x1xf32> to vector<8x128xf32>
    %105 = arith.divf %101, %104 : vector<8x128xf32>
    %c0_43 = arith.constant 0 : index
    %c0_44 = arith.constant 0 : index
    %106 = vector.load %arg6[%c0_43, %c0_44] : memref<8x128xf32, #tpu.memory_space<vmem>>, vector<8x128xf32>
    tpu.vector_store %arg6[%c0_43, %c0_44], %105 {strides = array<i32>} : memref<8x128xf32, #tpu.memory_space<vmem>>, vector<8x128xf32>,
    return
  }
}

</mosaic_0001>

<llo_original>
// kernel: _forward.1
$region0: #{_forward.1}
  #allocation0 [shape = 'u32[]', space=smem, size = 0x4, offset = 0x4, fixed_abs, tag = 'smem constant byte address 0x4 - core index']
  #allocation1 [shape = 'u32[144,128]{1,0:T(1,128)}', space=vmem, size = 0x12000, scoped, tag = 'internal scratch']
  %s0 = inlined_call_operand.hbm [shape: f32[8,32], index: 0, kind: input, shape index: {}]
  %s1 = inlined_call_operand.hbm [shape: bf16[32,384], index: 1, kind: input, shape index: {}]
  %s2 = inlined_call_operand.hbm [shape: bf16[384,256], index: 2, kind: input, shape index: {}]
  %s3 = inlined_call_operand.hbm [shape: bf16[256,128], index: 3, kind: input, shape index: {}]
  %s4 = inlined_call_operand.hbm [shape: bf16[128,128], index: 4, kind: input, shape index: {}]
  %s5 = inlined_call_operand.hbm [shape: f32[8,384], index: 5, kind: input, shape index: {}]
  %s6 = inlined_call_operand.hbm [shape: f32[8,128], index: 6, kind: output, shape index: {}]
  %s7 = sld [smem:[#allocation0]]
  $region58: #{_forward.1} parent=0
    _
  %s9 = ssub.s32 1, %s7
  %s10 = scalar_select 0, %s9, %s7
  $region1: #{_forward.1} parent=0
    #allocation2 [shape = 'u8[4096]{0}', space=vmem, size = 0x1000, scoped, tag = 'input window, operand 0, single buffered']
    #allocation3 [shape = 's32[1]{0}', space=sflag, size = 0x4, scoped, tag = 'scoped memory for _forward.1']
    #allocation4 [shape = 's32[1]{0}', space=sflag, size = 0x4, scoped, tag = 'scoped memory for _forward.1']
    #allocation5 [shape = 'u8[24576]{0}', space=vmem, size = 0x6000, scoped, tag = 'input window, operand 1, single buffered']
    #allocation6 [shape = 's32[1]{0}', space=sflag, size = 0x4, scoped, tag = 'scoped memory for _forward.1']
    #allocation7 [shape = 'u8[196608]{0}', space=vmem, size = 0x30000, scoped, tag = 'input window, operand 2, single buffered']
    #allocation8 [shape = 'u8[65536]{0}', space=vmem, size = 0x10000, scoped, tag = 'input window, operand 3, single buffered']
    #allocation9 [shape = 's32[1]{0}', space=sflag, size = 0x4, scoped, tag = 'scoped memory for _forward.1']
    #allocation10 [shape = 'u8[32768]{0}', space=vmem, size = 0x8000, scoped, tag = 'input window, operand 4, single buffered']
    #allocation11 [shape = 'u8[12288]{0}', space=vmem, size = 0x3000, scoped, tag = 'input window, operand 5, single buffered']
    #allocation12 [shape = 's32[1]{0}', space=sflag, size = 0x4, scoped, tag = 'scoped memory for _forward.1']
    #allocation13 [shape = 'u8[4096]{0}', space=vmem, size = 0x1000, scoped, tag = 'output window, operand 0, single buffered']
    %11 = vsyncpa [#allocation3], 0
    %12 = vsyncpa [#allocation6], 0
    %13 = vsyncpa [#allocation9], 0
    %14 = vsyncpa [#allocation12], 0
    %15 = vsyncpa [#allocation4], 0
    // Predicated region
    $region2: #{_forward.1} parent=1 // pred_check
      _
    $region3: #{_forward.1} parent=1 // pred_check_branch
      %17 = sbr.rel (0) target = $region5
    $region4: #{_forward.1} parent=1 // pred_region
      %s19 = ssub.s32 128, 128
      %20 = vsyncadd [#allocation3], %s19
      %s22 = sshll.u32 [#allocation2], 4
      %s23 = int_to_ptr.vmem [resolvable:$true] %s22
      %25 = dma.hbm_to_vmem [thread:$0]  %s0, 128, %s23, [#allocation3]
    $region5: #{_forward.1} parent=1 // pred_fallthru
      _
    // Predicated region
    $region6: #{_forward.1} parent=1 // pred_check
      _
    $region7: #{_forward.1} parent=1 // pred_check_branch
      %27 = sbr.rel (0) target = $region9
    $region8: #{_forward.1} parent=1 // pred_region
      %s29 = ssub.s32 768, 768
      %30 = vsyncadd [#allocation6], %s29
      %s31 = sshll.u32 [#allocation5], 4
      %s32 = int_to_ptr.vmem [resolvable:$true] %s31
      %37 = dma.hbm_to_vmem [thread:$0]  %s1, 768, %s32, [#allocation6], 192, 192, 12
    $region9: #{_forward.1} parent=1 // pred_fallthru
      _
    // Predicated region
    $region10: #{_forward.1} parent=1 // pred_check
      _
    $region11: #{_forward.1} parent=1 // pred_check_branch
      %39 = sbr.rel (0) target = $region13
    $region12: #{_forward.1} parent=1 // pred_region
      %s41 = ssub.s32 6144, 6144
      %42 = vsyncadd [#allocation6], %s41
      %s43 = sshll.u32 [#allocation7], 4
      %s44 = int_to_ptr.vmem [resolvable:$true] %s43
      %49 = dma.hbm_to_vmem [thread:$0]  %s2, 6144, %s44, [#allocation6], 128, 128, 8
    $region13: #{_forward.1} parent=1 // pred_fallthru
      _
    // Predicated region
    $region14: #{_forward.1} parent=1 // pred_check
      _
    $region15: #{_forward.1} parent=1 // pred_check_branch
      %51 = sbr.rel (0) target = $region17
    $region16: #{_forward.1} parent=1 // pred_region
      %s53 = ssub.s32 2048, 2048
      %54 = vsyncadd [#allocation9], %s53
      %s55 = sshll.u32 [#allocation8], 4
      %s56 = int_to_ptr.vmem [resolvable:$true] %s55
      %61 = dma.hbm_to_vmem [thread:$0]  %s3, 2048, %s56, [#allocation9], 64, 64, 4
    $region17: #{_forward.1} parent=1 // pred_fallthru
      _
    // Predicated region
    $region18: #{_forward.1} parent=1 // pred_check
      _
    $region19: #{_forward.1} parent=1 // pred_check_branch
      %63 = sbr.rel (0) target = $region21
    $region20: #{_forward.1} parent=1 // pred_region
      %s65 = ssub.s32 1024, 1024
      %66 = vsyncadd [#allocation9], %s65
      %s67 = sshll.u32 [#allocation10], 4
      %s68 = int_to_ptr.vmem [resolvable:$true] %s67
      %73 = dma.hbm_to_vmem [thread:$0]  %s4, 1024, %s68, [#allocation9], 64, 64, 4
    $region21: #{_forward.1} parent=1 // pred_fallthru
      _
    // Predicated region
    $region22: #{_forward.1} parent=1 // pred_check
      _
    $region23: #{_forward.1} parent=1 // pred_check_branch
      %75 = sbr.rel (0) target = $region25
    $region24: #{_forward.1} parent=1 // pred_region
      %s77 = ssub.s32 384, 384
      %78 = vsyncadd [#allocation12], %s77
      %s80 = sshll.u32 [#allocation11], 4
      %s81 = int_to_ptr.vmem [resolvable:$true] %s80
      %83 = dma.hbm_to_vmem [thread:$0]  %s5, 384, %s81, [#allocation12]
    $region25: #{_forward.1} parent=1 // pred_fallthru
      _
    // Predicated region
    $region26: #{_forward.1} parent=1 // pred_check
      _
    $region27: #{_forward.1} parent=1 // pred_check_branch
      %85 = sbr.rel (0) target = $region29
    $region28: #{_forward.1} parent=1 // pred_region
      %86 = dma.done [#allocation3], 128
    $region29: #{_forward.1} parent=1 // pred_fallthru
      _
    // Predicated region
    $region30: #{_forward.1} parent=1 // pred_check
      _
    $region31: #{_forward.1} parent=1 // pred_check_branch
      %88 = sbr.rel (0) target = $region33
    $region32: #{_forward.1} parent=1 // pred_region
      %89 = dma.done [#allocation6], 768
    $region33: #{_forward.1} parent=1 // pred_fallthru
      _
    // Predicated region
    $region34: #{_forward.1} parent=1 // pred_check
      _
    $region35: #{_forward.1} parent=1 // pred_check_branch
      %91 = sbr.rel (0) target = $region37
    $region36: #{_forward.1} parent=1 // pred_region
      %92 = dma.done [#allocation6], 6144
    $region37: #{_forward.1} parent=1 // pred_fallthru
      _
    // Predicated region
    $region38: #{_forward.1} parent=1 // pred_check
      _
    $region39: #{_forward.1} parent=1 // pred_check_branch
      %94 = sbr.rel (0) target = $region41
    $region40: #{_forward.1} parent=1 // pred_region
      %95 = dma.done [#allocation9], 2048
    $region41: #{_forward.1} parent=1 // pred_fallthru
      _
    // Predicated region
    $region42: #{_forward.1} parent=1 // pred_check
      _
    $region43: #{_forward.1} parent=1 // pred_check_branch
      %97 = sbr.rel (0) target = $region45
    $region44: #{_forward.1} parent=1 // pred_region
      %98 = dma.done [#allocation9], 1024
    $region45: #{_forward.1} parent=1 // pred_fallthru
      _
    // Predicated region
    $region46: #{_forward.1} parent=1 // pred_check
      _
    $region47: #{_forward.1} parent=1 // pred_check_branch
      %100 = sbr.rel (0) target = $region49
    $region48: #{_forward.1} parent=1 // pred_region
      %101 = dma.done [#allocation12], 384
    $region49: #{_forward.1} parent=1 // pred_fallthru
      _
    %v103 = vld [vmem:[#allocation2] sm:$0xff]
    %v104 = vpack.c.bf16 %v103, %v103
    %v105 = vld [vmem:[#allocation5] sm:$0xff]
    %v106 = vld [vmem:[#allocation5 + $0x8] sm:$0xf]
    %v107 = vld [vmem:[#allocation5 + $0xc] sm:$0xff]
    %v108 = vld [vmem:[#allocation5 + $0x14] sm:$0xf]
    %v109 = vld [vmem:[#allocation5 + $0x18] sm:$0xff]
    %v110 = vld [vmem:[#allocation5 + $0x20] sm:$0xf]
    %v111 = vld [vmem:[#allocation5 + $0x24] sm:$0xff]
    %v112 = vld [vmem:[#allocation5 + $0x2c] sm:$0xf]
    %v121 = vunpack.c.l.b16 %v105
    %v122 = vunpack.c.h.b16 %v105
    %v123 = vunpack.c.l.b16 %v106
    %v124 = vunpack.c.l.b16 %v107
    %v125 = vunpack.c.h.b16 %v107
    %v126 = vunpack.c.l.b16 %v108
    %v127 = vunpack.c.l.b16 %v109
    %v128 = vunpack.c.h.b16 %v109
    %v129 = vunpack.c.l.b16 %v110
    %v130 = vunpack.c.l.b16 %v111
    %v131 = vunpack.c.h.b16 %v111
    %v132 = vunpack.c.l.b16 %v112
    %v133 = vpack.c.b16 %v124, %v121
    %v134 = vpack.c.b16 %v125, %v122
    %v135 = vpack.c.b16 %v126, %v123
    %v136 = vpack.c.b16 %v130, %v127
    %v137 = vpack.c.b16 %v131, %v128
    %v138 = vpack.c.b16 %v132, %v129
    %vm145 = vcmask 261120
    %v147 = vsel %vm145, %v104, 0
    %149 = vmatprep.subr.bf16.mxu0 0
    %150 = vmatpush1.bf16.msra.mxu0 0
    %151 = vmatprep.subr.bf16.mxu0 0
    %152 = vmatpush1.bf16.msra.mxu0 0
    %153 = vmatprep.subr.bf16.mxu0 0
    %154 = vmatpush1.bf16.msra.mxu0 0
    %155 = vmatprep.subr.bf16.mxu0 0
    %156 = vmatpush1.bf16.msra.mxu0 0
    %157 = vmatprep.subr.bf16.mxu0 0
    %158 = vmatpush1.bf16.msra.mxu0 0
    %159 = vmatprep.subr.bf16.mxu0 0
    %160 = vmatpush1.bf16.msra.mxu0 0
    %161 = vmatprep.subr.bf16.mxu0 %v137
    %162 = vmatpush1.bf16.msra.mxu0 %v136
    %163 = vmatprep.subr.bf16.mxu0 %v134
    %164 = vmatpush1.bf16.msra.mxu0 %v133
    %165 = vmatprep.subr.bf16.mxu0 0
    %166 = vmatpush2.bf16.msra.mxu0 0
    %167 = vmatprep.subr.bf16.mxu0 0
    %168 = vmatpush2.bf16.msra.mxu0 0
    %169 = vmatprep.subr.bf16.mxu0 0
    %170 = vmatpush2.bf16.msra.mxu0 0
    %171 = vmatprep.subr.bf16.mxu0 0
    %172 = vmatpush2.bf16.msra.mxu0 0
    %173 = vmatprep.subr.bf16.mxu0 0
    %174 = vmatpush2.bf16.msra.mxu0 0
    %175 = vmatprep.subr.bf16.mxu0 0
    %176 = vmatpush2.bf16.msra.mxu0 0
    %177 = vmatprep.subr.bf16.mxu0 0
    %178 = vmatpush2.bf16.msra.mxu0 0
    %179 = vmatprep.subr.bf16.mxu0 0
    %180 = vmatpush2.bf16.msra.mxu0 0
    %181 = vmatprep.mubr.bf16.mxu0 0
    %182 = vmatmul.mubr.bf16.gmra.mxu0 %v147
    %v183 = vpop.f32.mrf.mxu0
    %v184 = vadd.f32 0.0, %v183
    %v185 = vpop.f32.mrf.mxu0
    %v186 = vadd.f32 0.0, %v185
    %v187 = vpop.f32.mrf.mxu0
    %v188 = vpop.f32.mrf.mxu0
    %189 = vdwg.mxu0
    %190 = vmatprep.subr.bf16.mxu0 0
    %191 = vmatpush1.bf16.msra.mxu0 0
    %192 = vmatprep.subr.bf16.mxu0 0
    %193 = vmatpush1.bf16.msra.mxu0 0
    %194 = vmatprep.subr.bf16.mxu0 0
    %195 = vmatpush1.bf16.msra.mxu0 0
    %196 = vmatprep.subr.bf16.mxu0 0
    %197 = vmatpush1.bf16.msra.mxu0 0
    %198 = vmatprep.subr.bf16.mxu0 0
    %199 = vmatpush1.bf16.msra.mxu0 0
    %200 = vmatprep.subr.bf16.mxu0 0
    %201 = vmatpush1.bf16.msra.mxu0 0
    %202 = vmatprep.subr.bf16.mxu0 0
    %203 = vmatpush1.bf16.msra.mxu0 %v138
    %204 = vmatprep.subr.bf16.mxu0 0
    %205 = vmatpush1.bf16.msra.mxu0 %v135
    %206 = vmatprep.subr.bf16.mxu0 0
    %207 = vmatpush2.bf16.msra.mxu0 0
    %208 = vmatprep.subr.bf16.mxu0 0
    %209 = vmatpush2.bf16.msra.mxu0 0
    %210 = vmatprep.subr.bf16.mxu0 0
    %211 = vmatpush2.bf16.msra.mxu0 0
    %212 = vmatprep.subr.bf16.mxu0 0
    %213 = vmatpush2.bf16.msra.mxu0 0
    %214 = vmatprep.subr.bf16.mxu0 0
    %215 = vmatpush2.bf16.msra.mxu0 0
    %216 = vmatprep.subr.bf16.mxu0 0
    %217 = vmatpush2.bf16.msra.mxu0 0
    %218 = vmatprep.subr.bf16.mxu0 0
    %219 = vmatpush2.bf16.msra.mxu0 0
    %220 = vmatprep.subr.bf16.mxu0 0
    %221 = vmatpush2.bf16.msra.mxu0 0
    %222 = vmatprep.mubr.bf16.mxu0 0
    %223 = vmatmul.mubr.bf16.gmra.mxu0 %v147
    %v224 = vpop.f32.mrf.mxu0
    %v225 = vadd.f32 0.0, %v224
    %v226 = vpop.f32.mrf.mxu0
    %v227 = vpop.f32.mrf.mxu0
    %v228 = vpop.f32.mrf.mxu0
    %229 = vdwg.mxu0
    %v230 = vld [vmem:[#allocation11] ss:$8 sm:$0x7]
    %s231 = scalar_lea.vmem [#allocation11], 1
    %v232 = vld [vmem:[%s231] ss:$8 sm:$0x7]
    %v233 = vrot.slane %v184, 4
    %v234 = vadd.f32 %v184, %v233
    %v235 = vrot.slane %v234, 2
    %v236 = vadd.f32 %v234, %v235
    %v237 = vrot.slane %v236, 1
    %v238 = vadd.f32 %v236, %v237
    %v239 = vrot.slane %v186, 4
    %v240 = vadd.f32 %v186, %v239
    %v241 = vrot.slane %v240, 2
    %v242 = vadd.f32 %v240, %v241
    %v243 = vrot.slane %v242, 1
    %v244 = vadd.f32 %v242, %v243
    %v245 = vrot.slane %v225, 4
    %v246 = vadd.f32 %v225, %v245
    %v247 = vrot.slane %v246, 2
    %v248 = vadd.f32 %v246, %v247
    %v249 = vrot.slane %v248, 1
    %v250 = vadd.f32 %v248, %v249
    %v251 = vrcp.pop 8.0
    %v252 = vmul.f32 %v238, %v251
    %v253 = vmul.f32 %v244, %v251
    %v254 = vmul.f32 %v250, %v251
    %v255 = vmul.f32 %v184, %v184
    %v256 = vmul.f32 %v186, %v186
    %v257 = vmul.f32 %v225, %v225
    %v258 = vrot.slane %v255, 4
    %v259 = vadd.f32 %v255, %v258
    %v260 = vrot.slane %v259, 2
    %v261 = vadd.f32 %v259, %v260
    %v262 = vrot.slane %v261, 1
    %v263 = vadd.f32 %v261, %v262
    %v264 = vrot.slane %v256, 4
    %v265 = vadd.f32 %v256, %v264
    %v266 = vrot.slane %v265, 2
    %v267 = vadd.f32 %v265, %v266
    %v268 = vrot.slane %v267, 1
    %v269 = vadd.f32 %v267, %v268
    %v270 = vrot.slane %v257, 4
    %v271 = vadd.f32 %v257, %v270
    %v272 = vrot.slane %v271, 2
    %v273 = vadd.f32 %v271, %v272
    %v274 = vrot.slane %v273, 1
    %v275 = vadd.f32 %v273, %v274
    %v276 = vmul.f32 %v263, %v251
    %v277 = vmul.f32 %v269, %v251
    %v278 = vmul.f32 %v275, %v251
    %v279 = vmul.f32 %v252, %v252
    %v280 = vmul.f32 %v253, %v253
    %v281 = vmul.f32 %v254, %v254
    %v282 = vsub.f32 %v276, %v279
    %v283 = vsub.f32 %v277, %v280
    %v284 = vsub.f32 %v278, %v281
    %v285 = vmax.f32 %v282, 0.0
    %v286 = vmax.f32 %v283, 0.0
    %v287 = vmax.f32 %v284, 0.0
    %v288 = vadd.f32 %v285, 1e-05
    %v289 = vadd.f32 %v286, 1e-05
    %v290 = vadd.f32 %v287, 1e-05
    %v291 = vrsqrt.pop %v288
    %v292 = vrsqrt.pop %v289
    %v293 = vrsqrt.pop %v290
    %v297 = vcombine.low %v291, %v292
    %v299 = vunpack.c.l.s4 1966171168
    %v300 = vunpack.c.0.s8 %v299
    %v301 = vlaneseq
    %v302 = vshrl.u32 %v301, 7
    %v303 = vsub.s32 %v300, %v302
    %v304 = vrot.slane %v297, %v303
    %v306 = vunpack.c.l.s4 1966171168
    %v307 = vunpack.c.0.s8 %v306
    %v308 = vlaneseq
    %v309 = vshrl.u32 %v308, 7
    %v310 = vsub.s32 %v307, %v309
    %v311 = vrot.slane %v293, %v310
    %v312 = vcombine.low %v304, %v311
    %v314 = vunpack.c.l.s4 1966171168
    %v315 = vunpack.c.0.s8 %v314
    %v316 = vlaneseq
    %v317 = vshrl.u32 %v316, 7
    %v318 = vsub.s32 %v315, %v317
    %v319 = vrot.slane %v312, %v318
    %v321 = vmul.f32 %v230, %v319
    %v323 = vlaneseq
    %v324 = vshrl.u32 %v323, 7
    %v325 = vsub.s32 0, %v324
    %v326 = vrot.slane %v321, %v325
    %v327 = vlaneseq
    %v328 = vshrl.u32 %v327, 7
    %v329 = vsub.s32 1, %v328
    %v330 = vrot.slane %v321, %v329
    %v331 = vlaneseq
    %v332 = vshrl.u32 %v331, 7
    %v333 = vsub.s32 2, %v332
    %v334 = vrot.slane %v321, %v333
    %v338 = vmul.f32 %v252, %v326
    %v339 = vmul.f32 %v253, %v330
    %v340 = vmul.f32 %v254, %v334
    %v344 = vcombine.low %v338, %v339
    %v346 = vunpack.c.l.s4 1966171168
    %v347 = vunpack.c.0.s8 %v346
    %v348 = vlaneseq
    %v349 = vshrl.u32 %v348, 7
    %v350 = vsub.s32 %v347, %v349
    %v351 = vrot.slane %v344, %v350
    %v353 = vunpack.c.l.s4 1966171168
    %v354 = vunpack.c.0.s8 %v353
    %v355 = vlaneseq
    %v356 = vshrl.u32 %v355, 7
    %v357 = vsub.s32 %v354, %v356
    %v358 = vrot.slane %v340, %v357
    %v359 = vcombine.low %v351, %v358
    %v361 = vunpack.c.l.s4 1966171168
    %v362 = vunpack.c.0.s8 %v361
    %v363 = vlaneseq
    %v364 = vshrl.u32 %v363, 7
    %v365 = vsub.s32 %v362, %v364
    %v366 = vrot.slane %v359, %v365
    %v368 = vsub.f32 %v232, %v366
    %v369 = vmul.f32 %v184, %v326
    %v370 = vmul.f32 %v186, %v330
    %v371 = vmul.f32 %v225, %v334
    %v373 = vlaneseq
    %v374 = vshrl.u32 %v373, 7
    %v375 = vsub.s32 0, %v374
    %v376 = vrot.slane %v368, %v375
    %v377 = vlaneseq
    %v378 = vshrl.u32 %v377, 7
    %v379 = vsub.s32 1, %v378
    %v380 = vrot.slane %v368, %v379
    %v381 = vlaneseq
    %v382 = vshrl.u32 %v381, 7
    %v383 = vsub.s32 2, %v382
    %v384 = vrot.slane %v368, %v383
    %v388 = vadd.f32 %v369, %v376
    %v389 = vadd.f32 %v370, %v380
    %v390 = vadd.f32 %v371, %v384
    %v391 = vmax.f32 %v388, 0.0
    %v392 = vmax.f32 %v389, 0.0
    %v393 = vmax.f32 %v390, 0.0
    %v394 = vpack.c.bf16 %v391, %v391
    %v395 = vpack.c.bf16 %v392, %v392
    %v396 = vpack.c.bf16 %v393, %v393
    %v397 = vld [vmem:[#allocation7] sm:$0xff]
    %v398 = vld [vmem:[#allocation7 + $0x8] sm:$0xff]
    %v399 = vld [vmem:[#allocation7 + $0x10] sm:$0xff]
    %v400 = vld [vmem:[#allocation7 + $0x18] sm:$0xff]
    %v401 = vld [vmem:[#allocation7 + $0x20] sm:$0xff]
    %v402 = vld [vmem:[#allocation7 + $0x28] sm:$0xff]
    %v403 = vld [vmem:[#allocation7 + $0x30] sm:$0xff]
    %v404 = vld [vmem:[#allocation7 + $0x38] sm:$0xff]
    %v405 = vld [vmem:[#allocation7 + $0x40] sm:$0xff]
    %v406 = vld [vmem:[#allocation7 + $0x48] sm:$0xff]
    %v407 = vld [vmem:[#allocation7 + $0x50] sm:$0xff]
    %v408 = vld [vmem:[#allocation7 + $0x58] sm:$0xff]
    %v409 = vld [vmem:[#allocation7 + $0x60] sm:$0xff]
    %v410 = vld [vmem:[#allocation7 + $0x68] sm:$0xff]
    %v411 = vld [vmem:[#allocation7 + $0x70] sm:$0xff]
    %v412 = vld [vmem:[#allocation7 + $0x78] sm:$0xff]
    %v413 = vld [vmem:[#allocation7 + $0x80] sm:$0xff]
    %v414 = vld [vmem:[#allocation7 + $0x88] sm:$0xff]
    %v415 = vld [vmem:[#allocation7 + $0x90] sm:$0xff]
    %v416 = vld [vmem:[#allocation7 + $0x98] sm:$0xff]
    %v417 = vld [vmem:[#allocation7 + $0xa0] sm:$0xff]
    %v418 = vld [vmem:[#allocation7 + $0xa8] sm:$0xff]
    %v419 = vld [vmem:[#allocation7 + $0xb0] sm:$0xff]
    %v420 = vld [vmem:[#allocation7 + $0xb8] sm:$0xff]
    %v421 = vld [vmem:[#allocation7 + $0xc0] sm:$0xff]
    %v422 = vld [vmem:[#allocation7 + $0xc8] sm:$0xff]
    %v423 = vld [vmem:[#allocation7 + $0xd0] sm:$0xff]
    %v424 = vld [vmem:[#allocation7 + $0xd8] sm:$0xff]
    %v425 = vld [vmem:[#allocation7 + $0xe0] sm:$0xff]
    %v426 = vld [vmem:[#allocation7 + $0xe8] sm:$0xff]
    %v427 = vld [vmem:[#allocation7 + $0xf0] sm:$0xff]
    %v428 = vld [vmem:[#allocation7 + $0xf8] sm:$0xff]
    %v429 = vld [vmem:[#allocation7 + $0x100] sm:$0xff]
    %v430 = vld [vmem:[#allocation7 + $0x108] sm:$0xff]
    %v431 = vld [vmem:[#allocation7 + $0x110] sm:$0xff]
    %v432 = vld [vmem:[#allocation7 + $0x118] sm:$0xff]
    %v433 = vld [vmem:[#allocation7 + $0x120] sm:$0xff]
    %v434 = vld [vmem:[#allocation7 + $0x128] sm:$0xff]
    %v435 = vld [vmem:[#allocation7 + $0x130] sm:$0xff]
    %v436 = vld [vmem:[#allocation7 + $0x138] sm:$0xff]
    %v437 = vld [vmem:[#allocation7 + $0x140] sm:$0xff]
    %v438 = vld [vmem:[#allocation7 + $0x148] sm:$0xff]
    %v439 = vld [vmem:[#allocation7 + $0x150] sm:$0xff]
    %v440 = vld [vmem:[#allocation7 + $0x158] sm:$0xff]
    %v441 = vld [vmem:[#allocation7 + $0x160] sm:$0xff]
    %v442 = vld [vmem:[#allocation7 + $0x168] sm:$0xff]
    %v443 = vld [vmem:[#allocation7 + $0x170] sm:$0xff]
    %v444 = vld [vmem:[#allocation7 + $0x178] sm:$0xff]
    %v493 = vunpack.c.l.b16 %v397
    %v494 = vunpack.c.h.b16 %v397
    %v495 = vunpack.c.l.b16 %v398
    %v496 = vunpack.c.h.b16 %v398
    %v497 = vunpack.c.l.b16 %v399
    %v498 = vunpack.c.h.b16 %v399
    %v499 = vunpack.c.l.b16 %v400
    %v500 = vunpack.c.h.b16 %v400
    %v501 = vunpack.c.l.b16 %v401
    %v502 = vunpack.c.h.b16 %v401
    %v503 = vunpack.c.l.b16 %v402
    %v504 = vunpack.c.h.b16 %v402
    %v505 = vunpack.c.l.b16 %v403
    %v506 = vunpack.c.h.b16 %v403
    %v507 = vunpack.c.l.b16 %v404
    %v508 = vunpack.c.h.b16 %v404
    %v509 = vunpack.c.l.b16 %v405
    %v510 = vunpack.c.h.b16 %v405
    %v511 = vunpack.c.l.b16 %v406
    %v512 = vunpack.c.h.b16 %v406
    %v513 = vunpack.c.l.b16 %v407
    %v514 = vunpack.c.h.b16 %v407
    %v515 = vunpack.c.l.b16 %v408
    %v516 = vunpack.c.h.b16 %v408
    %v517 = vunpack.c.l.b16 %v409
    %v518 = vunpack.c.h.b16 %v409
    %v519 = vunpack.c.l.b16 %v410
    %v520 = vunpack.c.h.b16 %v410
    %v521 = vunpack.c.l.b16 %v411
    %v522 = vunpack.c.h.b16 %v411
    %v523 = vunpack.c.l.b16 %v412
    %v524 = vunpack.c.h.b16 %v412
    %v525 = vunpack.c.l.b16 %v413
    %v526 = vunpack.c.h.b16 %v413
    %v527 = vunpack.c.l.b16 %v414
    %v528 = vunpack.c.h.b16 %v414
    %v529 = vunpack.c.l.b16 %v415
    %v530 = vunpack.c.h.b16 %v415
    %v531 = vunpack.c.l.b16 %v416
    %v532 = vunpack.c.h.b16 %v416
    %v533 = vunpack.c.l.b16 %v417
    %v534 = vunpack.c.h.b16 %v417
    %v535 = vunpack.c.l.b16 %v418
    %v536 = vunpack.c.h.b16 %v418
    %v537 = vunpack.c.l.b16 %v419
    %v538 = vunpack.c.h.b16 %v419
    %v539 = vunpack.c.l.b16 %v420
    %v540 = vunpack.c.h.b16 %v420
    %v541 = vunpack.c.l.b16 %v421
    %v542 = vunpack.c.h.b16 %v421
    %v543 = vunpack.c.l.b16 %v422
    %v544 = vunpack.c.h.b16 %v422
    %v545 = vunpack.c.l.b16 %v423
    %v546 = vunpack.c.h.b16 %v423
    %v547 = vunpack.c.l.b16 %v424
    %v548 = vunpack.c.h.b16 %v424
    %v549 = vunpack.c.l.b16 %v425
    %v550 = vunpack.c.h.b16 %v425
    %v551 = vunpack.c.l.b16 %v426
    %v552 = vunpack.c.h.b16 %v426
    %v553 = vunpack.c.l.b16 %v427
    %v554 = vunpack.c.h.b16 %v427
    %v555 = vunpack.c.l.b16 %v428
    %v556 = vunpack.c.h.b16 %v428
    %v557 = vunpack.c.l.b16 %v429
    %v558 = vunpack.c.h.b16 %v429
    %v559 = vunpack.c.l.b16 %v430
    %v560 = vunpack.c.h.b16 %v430
    %v561 = vunpack.c.l.b16 %v431
    %v562 = vunpack.c.h.b16 %v431
    %v563 = vunpack.c.l.b16 %v432
    %v564 = vunpack.c.h.b16 %v432
    %v565 = vunpack.c.l.b16 %v433
    %v566 = vunpack.c.h.b16 %v433
    %v567 = vunpack.c.l.b16 %v434
    %v568 = vunpack.c.h.b16 %v434
    %v569 = vunpack.c.l.b16 %v435
    %v570 = vunpack.c.h.b16 %v435
    %v571 = vunpack.c.l.b16 %v436
    %v572 = vunpack.c.h.b16 %v436
    %v573 = vunpack.c.l.b16 %v437
    %v574 = vunpack.c.h.b16 %v437
    %v575 = vunpack.c.l.b16 %v438
    %v576 = vunpack.c.h.b16 %v438
    %v577 = vunpack.c.l.b16 %v439
    %v578 = vunpack.c.h.b16 %v439
    %v579 = vunpack.c.l.b16 %v440
    %v580 = vunpack.c.h.b16 %v440
    %v581 = vunpack.c.l.b16 %v441
    %v582 = vunpack.c.h.b16 %v441
    %v583 = vunpack.c.l.b16 %v442
    %v584 = vunpack.c.h.b16 %v442
    %v585 = vunpack.c.l.b16 %v443
    %v586 = vunpack.c.h.b16 %v443
    %v587 = vunpack.c.l.b16 %v444
    %v588 = vunpack.c.h.b16 %v444
    %v589 = vpack.c.b16 %v495, %v493
    %v590 = vpack.c.b16 %v496, %v494
    %v591 = vpack.c.b16 %v499, %v497
    %v592 = vpack.c.b16 %v500, %v498
    %v593 = vpack.c.b16 %v503, %v501
    %v594 = vpack.c.b16 %v504, %v502
    %v595 = vpack.c.b16 %v507, %v505
    %v596 = vpack.c.b16 %v508, %v506
    %v597 = vpack.c.b16 %v511, %v509
    %v598 = vpack.c.b16 %v512, %v510
    %v599 = vpack.c.b16 %v515, %v513
    %v600 = vpack.c.b16 %v516, %v514
    %v601 = vpack.c.b16 %v519, %v517
    %v602 = vpack.c.b16 %v520, %v518
    %v603 = vpack.c.b16 %v523, %v521
    %v604 = vpack.c.b16 %v524, %v522
    %v605 = vpack.c.b16 %v527, %v525
    %v606 = vpack.c.b16 %v528, %v526
    %v607 = vpack.c.b16 %v531, %v529
    %v608 = vpack.c.b16 %v532, %v530
    %v609 = vpack.c.b16 %v535, %v533
    %v610 = vpack.c.b16 %v536, %v534
    %v611 = vpack.c.b16 %v539, %v537
    %v612 = vpack.c.b16 %v540, %v538
    %v613 = vpack.c.b16 %v543, %v541
    %v614 = vpack.c.b16 %v544, %v542
    %v615 = vpack.c.b16 %v547, %v545
    %v616 = vpack.c.b16 %v548, %v546
    %v617 = vpack.c.b16 %v551, %v549
    %v618 = vpack.c.b16 %v552, %v550
    %v619 = vpack.c.b16 %v555, %v553
    %v620 = vpack.c.b16 %v556, %v554
    %v621 = vpack.c.b16 %v559, %v557
    %v622 = vpack.c.b16 %v560, %v558
    %v623 = vpack.c.b16 %v563, %v561
    %v624 = vpack.c.b16 %v564, %v562
    %v625 = vpack.c.b16 %v567, %v565
    %v626 = vpack.c.b16 %v568, %v566
    %v627 = vpack.c.b16 %v571, %v569
    %v628 = vpack.c.b16 %v572, %v570
    %v629 = vpack.c.b16 %v575, %v573
    %v630 = vpack.c.b16 %v576, %v574
    %v631 = vpack.c.b16 %v579, %v577
    %v632 = vpack.c.b16 %v580, %v578
    %v633 = vpack.c.b16 %v583, %v581
    %v634 = vpack.c.b16 %v584, %v582
    %v635 = vpack.c.b16 %v587, %v585
    %v636 = vpack.c.b16 %v588, %v586
    %685 = vmatprep.subr.bf16.mxu0 %v604
    %686 = vmatpush1.bf16.msra.mxu0 %v603
    %687 = vmatprep.subr.bf16.mxu0 %v602
    %688 = vmatpush1.bf16.msra.mxu0 %v601
    %689 = vmatprep.subr.bf16.mxu0 %v600
    %690 = vmatpush1.bf16.msra.mxu0 %v599
    %691 = vmatprep.subr.bf16.mxu0 %v598
    %692 = vmatpush1.bf16.msra.mxu0 %v597
    %693 = vmatprep.subr.bf16.mxu0 %v596
    %694 = vmatpush1.bf16.msra.mxu0 %v595
    %695 = vmatprep.subr.bf16.mxu0 %v594
    %696 = vmatpush1.bf16.msra.mxu0 %v593
    %697 = vmatprep.subr.bf16.mxu0 %v592
    %698 = vmatpush1.bf16.msra.mxu0 %v591
    %699 = vmatprep.subr.bf16.mxu0 %v590
    %700 = vmatpush1.bf16.msra.mxu0 %v589
    %701 = vmatprep.subr.bf16.mxu0 %v620
    %702 = vmatpush2.bf16.msra.mxu0 %v619
    %703 = vmatprep.subr.bf16.mxu0 %v618
    %704 = vmatpush2.bf16.msra.mxu0 %v617
    %705 = vmatprep.subr.bf16.mxu0 %v616
    %706 = vmatpush2.bf16.msra.mxu0 %v615
    %707 = vmatprep.subr.bf16.mxu0 %v614
    %708 = vmatpush2.bf16.msra.mxu0 %v613
    %709 = vmatprep.subr.bf16.mxu0 %v612
    %710 = vmatpush2.bf16.msra.mxu0 %v611
    %711 = vmatprep.subr.bf16.mxu0 %v610
    %712 = vmatpush2.bf16.msra.mxu0 %v609
    %713 = vmatprep.subr.bf16.mxu0 %v608
    %714 = vmatpush2.bf16.msra.mxu0 %v607
    %715 = vmatprep.subr.bf16.mxu0 %v606
    %716 = vmatpush2.bf16.msra.mxu0 %v605
    %717 = vmatprep.mubr.bf16.mxu0 %v395
    %718 = vmatmul.mubr.bf16.gmra.mxu0 %v394
    %v719 = vpop.f32.mrf.mxu0
    %v720 = vadd.f32 0.0, %v719
    %v721 = vpop.f32.mrf.mxu0
    %v722 = vadd.f32 0.0, %v721
    %v723 = vpop.f32.mrf.mxu0
    %v724 = vpop.f32.mrf.mxu0
    %725 = vdwg.mxu0
    %726 = vmatprep.subr.bf16.mxu0 %v636
    %727 = vmatpush1.bf16.msra.mxu0 %v635
    %728 = vmatprep.subr.bf16.mxu0 %v634
    %729 = vmatpush1.bf16.msra.mxu0 %v633
    %730 = vmatprep.subr.bf16.mxu0 %v632
    %731 = vmatpush1.bf16.msra.mxu0 %v631
    %732 = vmatprep.subr.bf16.mxu0 %v630
    %733 = vmatpush1.bf16.msra.mxu0 %v629
    %734 = vmatprep.subr.bf16.mxu0 %v628
    %735 = vmatpush1.bf16.msra.mxu0 %v627
    %736 = vmatprep.subr.bf16.mxu0 %v626
    %737 = vmatpush1.bf16.msra.mxu0 %v625
    %738 = vmatprep.subr.bf16.mxu0 %v624
    %739 = vmatpush1.bf16.msra.mxu0 %v623
    %740 = vmatprep.subr.bf16.mxu0 %v622
    %741 = vmatpush1.bf16.msra.mxu0 %v621
    %742 = vmatprep.subr.bf16.mxu0 0
    %743 = vmatpush2.bf16.msra.mxu0 0
    %744 = vmatprep.subr.bf16.mxu0 0
    %745 = vmatpush2.bf16.msra.mxu0 0
    %746 = vmatprep.subr.bf16.mxu0 0
    %747 = vmatpush2.bf16.msra.mxu0 0
    %748 = vmatprep.subr.bf16.mxu0 0
    %749 = vmatpush2.bf16.msra.mxu0 0
    %750 = vmatprep.subr.bf16.mxu0 0
    %751 = vmatpush2.bf16.msra.mxu0 0
    %752 = vmatprep.subr.bf16.mxu0 0
    %753 = vmatpush2.bf16.msra.mxu0 0
    %754 = vmatprep.subr.bf16.mxu0 0
    %755 = vmatpush2.bf16.msra.mxu0 0
    %756 = vmatprep.subr.bf16.mxu0 0
    %757 = vmatpush2.bf16.msra.mxu0 0
    %758 = vmatprep.mubr.bf16.mxu0 0
    %759 = vmatmul.mubr.bf16.gmra.mxu0 %v396
    %v760 = vpop.f32.mrf.mxu0
    %v761 = vadd.f32 %v720, %v760
    %v762 = vpop.f32.mrf.mxu0
    %v763 = vadd.f32 %v722, %v762
    %v764 = vpop.f32.mrf.mxu0
    %v765 = vpop.f32.mrf.mxu0
    %766 = vdwg.mxu0
    %s767 = scalar_lea.vmem [#allocation11], 2
    %v768 = vld [vmem:[%s767] ss:$8 sm:$0x3]
    %s769 = scalar_lea.vmem [#allocation11], 3
    %v770 = vld [vmem:[%s769] ss:$8 sm:$0x3]
    %v771 = vrot.slane %v761, 4
    %v772 = vadd.f32 %v761, %v771
    %v773 = vrot.slane %v772, 2
    %v774 = vadd.f32 %v772, %v773
    %v775 = vrot.slane %v774, 1
    %v776 = vadd.f32 %v774, %v775
    %v777 = vrot.slane %v763, 4
    %v778 = vadd.f32 %v763, %v777
    %v779 = vrot.slane %v778, 2
    %v780 = vadd.f32 %v778, %v779
    %v781 = vrot.slane %v780, 1
    %v782 = vadd.f32 %v780, %v781
    %v783 = vmul.f32 %v776, %v251
    %v784 = vmul.f32 %v782, %v251
    %v785 = vmul.f32 %v761, %v761
    %v786 = vmul.f32 %v763, %v763
    %v787 = vrot.slane %v785, 4
    %v788 = vadd.f32 %v785, %v787
    %v789 = vrot.slane %v788, 2
    %v790 = vadd.f32 %v788, %v789
    %v791 = vrot.slane %v790, 1
    %v792 = vadd.f32 %v790, %v791
    %v793 = vrot.slane %v786, 4
    %v794 = vadd.f32 %v786, %v793
    %v795 = vrot.slane %v794, 2
    %v796 = vadd.f32 %v794, %v795
    %v797 = vrot.slane %v796, 1
    %v798 = vadd.f32 %v796, %v797
    %v799 = vmul.f32 %v792, %v251
    %v800 = vmul.f32 %v798, %v251
    %v801 = vmul.f32 %v783, %v783
    %v802 = vmul.f32 %v784, %v784
    %v803 = vsub.f32 %v799, %v801
    %v804 = vsub.f32 %v800, %v802
    %v805 = vmax.f32 %v803, 0.0
    %v806 = vmax.f32 %v804, 0.0
    %v807 = vadd.f32 %v805, 1e-05
    %v808 = vadd.f32 %v806, 1e-05
    %v809 = vrsqrt.pop %v807
    %v810 = vrsqrt.pop %v808
    %v813 = vcombine.low %v809, %v810
    %v815 = vunpack.c.l.s4 1966171168
    %v816 = vunpack.c.0.s8 %v815
    %v817 = vlaneseq
    %v818 = vshrl.u32 %v817, 7
    %v819 = vsub.s32 %v816, %v818
    %v820 = vrot.slane %v813, %v819
    %v822 = vunpack.c.l.s4 1966171168
    %v823 = vunpack.c.0.s8 %v822
    %v824 = vlaneseq
    %v825 = vshrl.u32 %v824, 7
    %v826 = vsub.s32 %v823, %v825
    %v827 = vrot.slane %v820, %v826
    %v829 = vmul.f32 %v768, %v827
    %v831 = vlaneseq
    %v832 = vshrl.u32 %v831, 7
    %v833 = vsub.s32 0, %v832
    %v834 = vrot.slane %v829, %v833
    %v835 = vlaneseq
    %v836 = vshrl.u32 %v835, 7
    %v837 = vsub.s32 1, %v836
    %v838 = vrot.slane %v829, %v837
    %v841 = vmul.f32 %v783, %v834
    %v842 = vmul.f32 %v784, %v838
    %v845 = vcombine.low %v841, %v842
    %v847 = vunpack.c.l.s4 1966171168
    %v848 = vunpack.c.0.s8 %v847
    %v849 = vlaneseq
    %v850 = vshrl.u32 %v849, 7
    %v851 = vsub.s32 %v848, %v850
    %v852 = vrot.slane %v845, %v851
    %v854 = vunpack.c.l.s4 1966171168
    %v855 = vunpack.c.0.s8 %v854
    %v856 = vlaneseq
    %v857 = vshrl.u32 %v856, 7
    %v858 = vsub.s32 %v855, %v857
    %v859 = vrot.slane %v852, %v858
    %v861 = vsub.f32 %v770, %v859
    %v862 = vmul.f32 %v761, %v834
    %v863 = vmul.f32 %v763, %v838
    %v865 = vlaneseq
    %v866 = vshrl.u32 %v865, 7
    %v867 = vsub.s32 0, %v866
    %v868 = vrot.slane %v861, %v867
    %v869 = vlaneseq
    %v870 = vshrl.u32 %v869, 7
    %v871 = vsub.s32 1, %v870
    %v872 = vrot.slane %v861, %v871
    %v875 = vadd.f32 %v862, %v868
    %v876 = vadd.f32 %v863, %v872
    %v877 = vmax.f32 %v875, 0.0
    %v878 = vmax.f32 %v876, 0.0
    %v879 = vpack.c.bf16 %v877, %v877
    %v880 = vpack.c.bf16 %v878, %v878
    %v881 = vld [vmem:[#allocation8] sm:$0xf]
    %v882 = vld [vmem:[#allocation8 + $0x4] sm:$0xf]
    %v883 = vld [vmem:[#allocation8 + $0x8] sm:$0xf]
    %v884 = vld [vmem:[#allocation8 + $0xc] sm:$0xf]
    %v885 = vld [vmem:[#allocation8 + $0x10] sm:$0xf]
    %v886 = vld [vmem:[#allocation8 + $0x14] sm:$0xf]
    %v887 = vld [vmem:[#allocation8 + $0x18] sm:$0xf]
    %v888 = vld [vmem:[#allocation8 + $0x1c] sm:$0xf]
    %v889 = vld [vmem:[#allocation8 + $0x20] sm:$0xf]
    %v890 = vld [vmem:[#allocation8 + $0x24] sm:$0xf]
    %v891 = vld [vmem:[#allocation8 + $0x28] sm:$0xf]
    %v892 = vld [vmem:[#allocation8 + $0x2c] sm:$0xf]
    %v893 = vld [vmem:[#allocation8 + $0x30] sm:$0xf]
    %v894 = vld [vmem:[#allocation8 + $0x34] sm:$0xf]
    %v895 = vld [vmem:[#allocation8 + $0x38] sm:$0xf]
    %v896 = vld [vmem:[#allocation8 + $0x3c] sm:$0xf]
    %v897 = vld [vmem:[#allocation8 + $0x40] sm:$0xf]
    %v898 = vld [vmem:[#allocation8 + $0x44] sm:$0xf]
    %v899 = vld [vmem:[#allocation8 + $0x48] sm:$0xf]
    %v900 = vld [vmem:[#allocation8 + $0x4c] sm:$0xf]
    %v901 = vld [vmem:[#allocation8 + $0x50] sm:$0xf]
    %v902 = vld [vmem:[#allocation8 + $0x54] sm:$0xf]
    %v903 = vld [vmem:[#allocation8 + $0x58] sm:$0xf]
    %v904 = vld [vmem:[#allocation8 + $0x5c] sm:$0xf]
    %v905 = vld [vmem:[#allocation8 + $0x60] sm:$0xf]
    %v906 = vld [vmem:[#allocation8 + $0x64] sm:$0xf]
    %v907 = vld [vmem:[#allocation8 + $0x68] sm:$0xf]
    %v908 = vld [vmem:[#allocation8 + $0x6c] sm:$0xf]
    %v909 = vld [vmem:[#allocation8 + $0x70] sm:$0xf]
    %v910 = vld [vmem:[#allocation8 + $0x74] sm:$0xf]
    %v911 = vld [vmem:[#allocation8 + $0x78] sm:$0xf]
    %v912 = vld [vmem:[#allocation8 + $0x7c] sm:$0xf]
    %v945 = vunpack.c.l.b16 %v881
    %v946 = vunpack.c.l.b16 %v882
    %v947 = vunpack.c.l.b16 %v883
    %v948 = vunpack.c.l.b16 %v884
    %v949 = vunpack.c.l.b16 %v885
    %v950 = vunpack.c.l.b16 %v886
    %v951 = vunpack.c.l.b16 %v887
    %v952 = vunpack.c.l.b16 %v888
    %v953 = vunpack.c.l.b16 %v889
    %v954 = vunpack.c.l.b16 %v890
    %v955 = vunpack.c.l.b16 %v891
    %v956 = vunpack.c.l.b16 %v892
    %v957 = vunpack.c.l.b16 %v893
    %v958 = vunpack.c.l.b16 %v894
    %v959 = vunpack.c.l.b16 %v895
    %v960 = vunpack.c.l.b16 %v896
    %v961 = vunpack.c.l.b16 %v897
    %v962 = vunpack.c.l.b16 %v898
    %v963 = vunpack.c.l.b16 %v899
    %v964 = vunpack.c.l.b16 %v900
    %v965 = vunpack.c.l.b16 %v901
    %v966 = vunpack.c.l.b16 %v902
    %v967 = vunpack.c.l.b16 %v903
    %v968 = vunpack.c.l.b16 %v904
    %v969 = vunpack.c.l.b16 %v905
    %v970 = vunpack.c.l.b16 %v906
    %v971 = vunpack.c.l.b16 %v907
    %v972 = vunpack.c.l.b16 %v908
    %v973 = vunpack.c.l.b16 %v909
    %v974 = vunpack.c.l.b16 %v910
    %v975 = vunpack.c.l.b16 %v911
    %v976 = vunpack.c.l.b16 %v912
    %v977 = vpack.c.b16 %v946, %v945
    %v978 = vpack.c.b16 %v948, %v947
    %v979 = vpack.c.b16 %v950, %v949
    %v980 = vpack.c.b16 %v952, %v951
    %v981 = vpack.c.b16 %v954, %v953
    %v982 = vpack.c.b16 %v956, %v955
    %v983 = vpack.c.b16 %v958, %v957
    %v984 = vpack.c.b16 %v960, %v959
    %v985 = vpack.c.b16 %v962, %v961
    %v986 = vpack.c.b16 %v964, %v963
    %v987 = vpack.c.b16 %v966, %v965
    %v988 = vpack.c.b16 %v968, %v967
    %v989 = vpack.c.b16 %v970, %v969
    %v990 = vpack.c.b16 %v972, %v971
    %v991 = vpack.c.b16 %v974, %v973
    %v992 = vpack.c.b16 %v976, %v975
    %1009 = vmatprep.subr.bf16.mxu0 0
    %1010 = vmatpush1.bf16.msra.mxu0 %v984
    %1011 = vmatprep.subr.bf16.mxu0 0
    %1012 = vmatpush1.bf16.msra.mxu0 %v983
    %1013 = vmatprep.subr.bf16.mxu0 0
    %1014 = vmatpush1.bf16.msra.mxu0 %v982
    %1015 = vmatprep.subr.bf16.mxu0 0
    %1016 = vmatpush1.bf16.msra.mxu0 %v981
    %1017 = vmatprep.subr.bf16.mxu0 0
    %1018 = vmatpush1.bf16.msra.mxu0 %v980
    %1019 = vmatprep.subr.bf16.mxu0 0
    %1020 = vmatpush1.bf16.msra.mxu0 %v979
    %1021 = vmatprep.subr.bf16.mxu0 0
    %1022 = vmatpush1.bf16.msra.mxu0 %v978
    %1023 = vmatprep.subr.bf16.mxu0 0
    %1024 = vmatpush1.bf16.msra.mxu0 %v977
    %1025 = vmatprep.subr.bf16.mxu0 0
    %1026 = vmatpush2.bf16.msra.mxu0 %v992
    %1027 = vmatprep.subr.bf16.mxu0 0
    %1028 = vmatpush2.bf16.msra.mxu0 %v991
    %1029 = vmatprep.subr.bf16.mxu0 0
    %1030 = vmatpush2.bf16.msra.mxu0 %v990
    %1031 = vmatprep.subr.bf16.mxu0 0
    %1032 = vmatpush2.bf16.msra.mxu0 %v989
    %1033 = vmatprep.subr.bf16.mxu0 0
    %1034 = vmatpush2.bf16.msra.mxu0 %v988
    %1035 = vmatprep.subr.bf16.mxu0 0
    %1036 = vmatpush2.bf16.msra.mxu0 %v987
    %1037 = vmatprep.subr.bf16.mxu0 0
    %1038 = vmatpush2.bf16.msra.mxu0 %v986
    %1039 = vmatprep.subr.bf16.mxu0 0
    %1040 = vmatpush2.bf16.msra.mxu0 %v985
    %1041 = vmatprep.mubr.bf16.mxu0 %v880
    %1042 = vmatmul.mubr.bf16.gmra.mxu0 %v879
    %v1043 = vpop.f32.mrf.mxu0
    %v1044 = vadd.f32 0.0, %v1043
    %v1045 = vpop.f32.mrf.mxu0
    %v1046 = vpop.f32.mrf.mxu0
    %v1047 = vpop.f32.mrf.mxu0
    %1048 = vdwg.mxu0
    %v1049 = vld [vmem:[#allocation11 + $0x4] ss:$0 sm:$0xff]
    %v1050 = vld [vmem:[#allocation11 + $0x5] ss:$0 sm:$0xff]
    %v1051 = vrot.slane %v1044, 4
    %v1052 = vadd.f32 %v1044, %v1051
    %v1053 = vrot.slane %v1052, 2
    %v1054 = vadd.f32 %v1052, %v1053
    %v1055 = vrot.slane %v1054, 1
    %v1056 = vadd.f32 %v1054, %v1055
    %v1057 = vmul.f32 %v1056, %v251
    %v1058 = vmul.f32 %v1044, %v1044
    %v1059 = vrot.slane %v1058, 4
    %v1060 = vadd.f32 %v1058, %v1059
    %v1061 = vrot.slane %v1060, 2
    %v1062 = vadd.f32 %v1060, %v1061
    %v1063 = vrot.slane %v1062, 1
    %v1064 = vadd.f32 %v1062, %v1063
    %v1065 = vmul.f32 %v1064, %v251
    %v1066 = vmul.f32 %v1057, %v1057
    %v1067 = vsub.f32 %v1065, %v1066
    %v1068 = vmax.f32 %v1067, 0.0
    %v1069 = vadd.f32 %v1068, 1e-05
    %v1070 = vrsqrt.pop %v1069
    %v1071 = vmul.f32 %v1049, %v1070
    %v1072 = vmul.f32 %v1057, %v1071
    %v1073 = vsub.f32 %v1050, %v1072
    %v1074 = vmul.f32 %v1044, %v1071
    %v1075 = vadd.f32 %v1074, %v1073
    %v1076 = vmax.f32 %v1075, 0.0
    %v1077 = vpack.c.bf16 %v1076, %v1076
    %v1078 = vld [vmem:[#allocation10] sm:$0xf]
    %v1079 = vld [vmem:[#allocation10 + $0x4] sm:$0xf]
    %v1080 = vld [vmem:[#allocation10 + $0x8] sm:$0xf]
    %v1081 = vld [vmem:[#allocation10 + $0xc] sm:$0xf]
    %v1082 = vld [vmem:[#allocation10 + $0x10] sm:$0xf]
    %v1083 = vld [vmem:[#allocation10 + $0x14] sm:$0xf]
    %v1084 = vld [vmem:[#allocation10 + $0x18] sm:$0xf]
    %v1085 = vld [vmem:[#allocation10 + $0x1c] sm:$0xf]
    %v1086 = vld [vmem:[#allocation10 + $0x20] sm:$0xf]
    %v1087 = vld [vmem:[#allocation10 + $0x24] sm:$0xf]
    %v1088 = vld [vmem:[#allocation10 + $0x28] sm:$0xf]
    %v1089 = vld [vmem:[#allocation10 + $0x2c] sm:$0xf]
    %v1090 = vld [vmem:[#allocation10 + $0x30] sm:$0xf]
    %v1091 = vld [vmem:[#allocation10 + $0x34] sm:$0xf]
    %v1092 = vld [vmem:[#allocation10 + $0x38] sm:$0xf]
    %v1093 = vld [vmem:[#allocation10 + $0x3c] sm:$0xf]
    %v1094 = vld [vmem:[#allocation11 + $0x6] ss:$0 sm:$0xff]
    %v1111 = vunpack.c.l.b16 %v1078
    %v1112 = vunpack.c.l.b16 %v1079
    %v1113 = vunpack.c.l.b16 %v1080
    %v1114 = vunpack.c.l.b16 %v1081
    %v1115 = vunpack.c.l.b16 %v1082
    %v1116 = vunpack.c.l.b16 %v1083
    %v1117 = vunpack.c.l.b16 %v1084
    %v1118 = vunpack.c.l.b16 %v1085
    %v1119 = vunpack.c.l.b16 %v1086
    %v1120 = vunpack.c.l.b16 %v1087
    %v1121 = vunpack.c.l.b16 %v1088
    %v1122 = vunpack.c.l.b16 %v1089
    %v1123 = vunpack.c.l.b16 %v1090
    %v1124 = vunpack.c.l.b16 %v1091
    %v1125 = vunpack.c.l.b16 %v1092
    %v1126 = vunpack.c.l.b16 %v1093
    %v1127 = vpack.c.b16 %v1112, %v1111
    %v1128 = vpack.c.b16 %v1114, %v1113
    %v1129 = vpack.c.b16 %v1116, %v1115
    %v1130 = vpack.c.b16 %v1118, %v1117
    %v1131 = vpack.c.b16 %v1120, %v1119
    %v1132 = vpack.c.b16 %v1122, %v1121
    %v1133 = vpack.c.b16 %v1124, %v1123
    %v1134 = vpack.c.b16 %v1126, %v1125
    %1143 = vmatprep.subr.bf16.mxu0 0
    %1144 = vmatpush1.bf16.msra.mxu0 %v1134
    %1145 = vmatprep.subr.bf16.mxu0 0
    %1146 = vmatpush1.bf16.msra.mxu0 %v1133
    %1147 = vmatprep.subr.bf16.mxu0 0
    %1148 = vmatpush1.bf16.msra.mxu0 %v1132
    %1149 = vmatprep.subr.bf16.mxu0 0
    %1150 = vmatpush1.bf16.msra.mxu0 %v1131
    %1151 = vmatprep.subr.bf16.mxu0 0
    %1152 = vmatpush1.bf16.msra.mxu0 %v1130
    %1153 = vmatprep.subr.bf16.mxu0 0
    %1154 = vmatpush1.bf16.msra.mxu0 %v1129
    %1155 = vmatprep.subr.bf16.mxu0 0
    %1156 = vmatpush1.bf16.msra.mxu0 %v1128
    %1157 = vmatprep.subr.bf16.mxu0 0
    %1158 = vmatpush1.bf16.msra.mxu0 %v1127
    %1159 = vmatprep.subr.bf16.mxu0 0
    %1160 = vmatpush2.bf16.msra.mxu0 0
    %1161 = vmatprep.subr.bf16.mxu0 0
    %1162 = vmatpush2.bf16.msra.mxu0 0
    %1163 = vmatprep.subr.bf16.mxu0 0
    %1164 = vmatpush2.bf16.msra.mxu0 0
    %1165 = vmatprep.subr.bf16.mxu0 0
    %1166 = vmatpush2.bf16.msra.mxu0 0
    %1167 = vmatprep.subr.bf16.mxu0 0
    %1168 = vmatpush2.bf16.msra.mxu0 0
    %1169 = vmatprep.subr.bf16.mxu0 0
    %1170 = vmatpush2.bf16.msra.mxu0 0
    %1171 = vmatprep.subr.bf16.mxu0 0
    %1172 = vmatpush2.bf16.msra.mxu0 0
    %1173 = vmatprep.subr.bf16.mxu0 0
    %1174 = vmatpush2.bf16.msra.mxu0 0
    %1175 = vmatprep.mubr.bf16.mxu0 0
    %1176 = vmatmul.mubr.bf16.gmra.mxu0 %v1077
    %v1177 = vpop.f32.mrf.mxu0
    %v1178 = vadd.f32 %v1094, %v1177
    %v1179 = vpop.f32.mrf.mxu0
    %v1180 = vpop.f32.mrf.mxu0
    %v1181 = vpop.f32.mrf.mxu0
    %1182 = vdwg.mxu0
    %1183 = vmax.xlane.f32.xlu0 %v1178
    %v1184 = vpop.xlane.xlu0 %1183
    %v1185 = vsub.f32 %v1178, %v1184
    %v1186 = vmul.f32 %v1185, 1.442695
    %v1187 = vpow.pop %v1186
    %1188 = vadd.xlane.f32.xlu0 %v1187
    %v1189 = vpop.xlane.xlu0 %1188
    %v1190 = vrcp.pop %v1189
    %v1191 = vmul.f32 %v1187, %v1190
    %1192 = vst [vmem:[#allocation13] sm:$0xff] %v1191
    // Predicated region
    $region50: #{_forward.1} parent=1 // pred_check
      _
    $region51: #{_forward.1} parent=1 // pred_check_branch
      %1194 = sbr.rel (0) target = $region53
    $region52: #{_forward.1} parent=1 // pred_region
      %s1196 = ssub.s32 128, 128
      %1197 = vsyncadd [#allocation4], %s1196
      %s1199 = sshll.u32 [#allocation13], 4
      %s1200 = int_to_ptr.vmem [resolvable:$true] %s1199
      %1202 = dma.vmem_to_hbm [thread:$0]  %s1200, 128, %s6, [#allocation4]
    $region53: #{_forward.1} parent=1 // pred_fallthru
      _
    // Predicated region
    $region54: #{_forward.1} parent=1 // pred_check
      _
    $region55: #{_forward.1} parent=1 // pred_check_branch
      %1204 = sbr.rel (0) target = $region57
    $region56: #{_forward.1} parent=1 // pred_region
      %1205 = dma.done [#allocation4], 128
    $region57: #{_forward.1} parent=1 // pred_fallthru
      _
    %1206 = vsyncpa [#allocation3], 1
    %1207 = vsyncpa [#allocation6], 1
    %1208 = vsyncpa [#allocation9], 1
    %1209 = vsyncpa [#allocation12], 1
    %1210 = vsyncpa [#allocation4], 1

</llo_original>
